<compile_context>
chip_gen: v6e
topology: v6e:2x2x1
jax: 0.10.0
libtpu: 0.0.40
codegen_flags: <defaults>
</compile_context>

<pallas_src>
import jax
import jax.numpy as jnp
import numpy as np
from jax.experimental import pallas as pl
from jax.experimental.pallas import tpu as pltpu

HIDDEN = 32


# --------------------------------------------------------------------------- kernel
def dcrnn_step_kernel(x_ref, h_ref, wx_ref, wh_ref, wo_ref, bo_ref,
                      y_ref, h_out_ref):
    f32 = jnp.float32
    x = x_ref[...]                     # (TM, F+1): last column is all-ones (bias row)
    h = h_ref[...]                     # (TM, 32)
    wh = wh_ref[...]                   # (32, 96): lanes [0:64] * H (z|r), [64:96] * (H*R)

    # Fused gate input projection (+ biases via the ones column):
    # lanes [0:32] = z, [32:64] = r, [64:96] = h_tilde contribution from X.
    xw = jnp.dot(x, wx_ref[...], preferred_element_type=f32)              # (TM, 96)

    # Update / reset gates share the H operand -> a single 64-lane MXU op.
    zr = jax.nn.sigmoid(
        xw[:, :64] + jnp.dot(h, wh[:, :64], preferred_element_type=f32))  # (TM, 64)
    z = zr[:, :32]
    r = zr[:, 32:]

    # Candidate state.
    h_tilde = jnp.tanh(
        xw[:, 64:] + jnp.dot(h * r, wh[:, 64:], preferred_element_type=f32))

    h_new = z * h + (1.0 - z) * h_tilde
    h_out_ref[...] = h_new

    # Readout: relu(H_new) @ Wo.  Wo is zero-padded to 128 lanes (col 0 real) so
    # the output store is lane-dense / unmasked; the wrapper slices column 0.
    y_ref[...] = (jnp.dot(jnp.maximum(h_new, 0.0), wo_ref[...],
                          preferred_element_type=f32) + bo_ref[...])


# --------------------------------------------------------------------------- wrapper
def recurrent_gcn_dcrnn_forward(packed, x, edge_index=None, edge_weight=None,
                                h_prev=None, row_tile=256):
    """One RecurrentGCN_DCRNN forward: y = Linear(relu(DCRNN_K1(x, H))).

    edge_index / edge_weight are accepted to mirror the torch module signature;
    with filter size K=1 the diffusion convolution reduces to its order-0
    (identity) term, so the graph tensors do not influence the output.
    Returns (y: (N, 1), h_new: (N, 32)).
    """
    del edge_index, edge_weight  # unused for K=1 (see module spec / TODO above)
    n, f = x.shape
    if h_prev is None:
        h_prev = jnp.zeros((n, HIDDEN), jnp.float32)   # DCRNN._set_hidden_state(None)
    h_prev = h_prev.astype(jnp.float32)

    # Append the all-ones bias column (gate biases live in the last row of wx).
    x_aug = jnp.concatenate(
        [x.astype(jnp.float32), jnp.ones((n, 1), jnp.float32)], axis=1)
    fa = f + 1

    # Node-row tile: multiple of 8 sublanes; pad N up to a tile multiple.
    tm = max(8, (min(row_tile, max(8, n)) // 8) * 8)
    n_pad = pl.cdiv(n, tm) * tm
    if n_pad != n:
        x_aug = jnp.pad(x_aug, ((0, n_pad - n), (0, 0)))
        h_prev = jnp.pad(h_prev, ((0, n_pad - n), (0, 0)))

    rows = lambda i: (i, 0)
    full = lambda i: (0, 0)

    y_slab, h_new = pl.pallas_call(
        dcrnn_step_kernel,
        out_shape=(
            jax.ShapeDtypeStruct((n_pad, 128), jnp.float32),   # y slab (col 0 = prediction)
            jax.ShapeDtypeStruct((n_pad, HIDDEN), jnp.float32),
        ),
        grid=(n_pad // tm,),
        in_specs=[
            pl.BlockSpec((tm, fa), rows),          # X (+ ones column), row-tiled
            pl.BlockSpec((tm, HIDDEN), rows),      # previous hidden state, row-tiled
            pl.BlockSpec((fa, 96), full),          # fused gate input weights (+bias row)
            pl.BlockSpec((HIDDEN, 96), full),      # fused gate hidden weights
            pl.BlockSpec((HIDDEN, 128), full),     # readout weight (lane padded)
            pl.BlockSpec((1, 128), full),          # readout bias (lane padded)
        ],
        out_specs=(
            pl.BlockSpec((tm, 128), rows),
            pl.BlockSpec((tm, HIDDEN), rows),
        ),
        compiler_params=pltpu.CompilerParams(
            dimension_semantics=("parallel",)),    # node-row blocks are independent
    )(x_aug, h_prev, packed["wx"], packed["wh"], packed["wo"], packed["bo"])

    return y_slab[:n, :1], h_new[:n]


# --------------------------------------------------------------------------- params
def init_raw_params(key, node_features):
    """Synthetic parameters with the exact shapes of DCRNN(F, 32, 1) + Linear(32, 1)."""
    f, hd = node_features, HIDDEN
    cin = f + hd
    ks = jax.random.split(key, 8)

    def glorot(k, shape):
        fan_in, fan_out = shape[-2], shape[-1]
        lim = (6.0 / (fan_in + fan_out)) ** 0.5
        return jax.random.uniform(k, shape, jnp.float32, -lim, lim)

    return dict(
        wz=glorot(ks[0], (2, 1, cin, hd)), bz=0.01 * jax.random.normal(ks[1], (hd,)),
        wr=glorot(ks[2], (2, 1, cin, hd)), br=0.01 * jax.random.normal(ks[3], (hd,)),
        wh=glorot(ks[4], (2, 1, cin, hd)), bh=0.01 * jax.random.normal(ks[5], (hd,)),
        w_lin=glorot(ks[6], (hd, 1)), b_lin=0.01 * jax.random.normal(ks[7], (1,)),
    )


def pack_params(raw, node_features):
    """Host-side folding / lane packing of the raw DCRNN parameters."""
    f, hd = node_features, HIDDEN
    # DConv with K=1 keeps only the order-0 term: fold both diffusion directions.
    wz = raw["wz"][0, 0] + raw["wz"][1, 0]                       # (f+hd, hd)
    wr = raw["wr"][0, 0] + raw["wr"][1, 0]
    wh = raw["wh"][0, 0] + raw["wh"][1, 0]
    # Gate-concatenated weights: lanes [0:32]=z | [32:64]=r | [64:96]=h_tilde.
    wx = jnp.concatenate([wz[:f], wr[:f], wh[:f]], axis=1)       # (f, 96)  multiplies X
    bg = jnp.concatenate([raw["bz"], raw["br"], raw["bh"]])[None, :]          # (1, 96)
    wx_aug = jnp.concatenate([wx, bg], axis=0)                   # (f+1, 96) bias baked in
    wh_slab = jnp.concatenate([wz[f:], wr[f:], wh[f:]], axis=1)  # (hd, 96)  multiplies H / H*R
    # Lane-dense readout: Linear(32, 1) padded to 128 output lanes (column 0 real).
    wo = jnp.zeros((hd, 128), jnp.float32).at[:, 0:1].set(raw["w_lin"])
    bo = jnp.zeros((1, 128), jnp.float32).at[:, 0:1].set(raw["b_lin"][None, :])
    return dict(wx=wx_aug, wh=wh_slab, wo=wo, bo=bo)


# --------------------------------------------------------------------------- reference
def dcrnn_linear_reference(raw, x, h_prev):
    """Pure NumPy float64 reference for DCRNN(K=1) + ReLU + Linear(32, 1)."""
    p = {k: np.asarray(v, np.float64) for k, v in raw.items()}
    x = np.asarray(x, np.float64)
    h = np.asarray(h_prev, np.float64)

    def sigmoid(v):
        return 1.0 / (1.0 + np.exp(-v))

    def dconv_k1(xc, w, b):
        return xc @ w[0, 0] + xc @ w[1, 0] + b

    xh = np.concatenate([x, h], axis=1)
    z = sigmoid(dconv_k1(xh, p["wz"], p["bz"]))
    r = sigmoid(dconv_k1(xh, p["wr"], p["br"]))
    h_tilde = np.tanh(dconv_k1(np.concatenate([x, h * r], axis=1), p["wh"], p["bh"]))
    h_new = z * h + (1.0 - z) * h_tilde
    y = np.maximum(h_new, 0.0) @ p["w_lin"] + p["b_lin"]
    return y, h_new


# --------------------------------------------------------------------------- main
if __name__ == "__main__":
    key = jax.random.PRNGKey(0)
    k_x, k_w, k_h, k_p = jax.random.split(key, 4)

    num_nodes = 16
    node_features = 4

    # Bidirectional ring graph, mirrors the module's (edge_index, edge_weight) inputs.
    idx = jnp.arange(num_nodes, dtype=jnp.int32)
    src = jnp.concatenate([idx, (idx + 1) % num_nodes])
    dst = jnp.concatenate([(idx + 1) % num_nodes, idx])
    edge_index = jnp.stack([src, dst], axis=0)                              # (2, 32)
    edge_weight = jax.random.uniform(k_w, (edge_index.shape[1],),
                                     jnp.float32, 0.5, 1.5)                 # (32,)

    x = jax.random.normal(k_x, (num_nodes, node_features), jnp.float32)     # (16, 4)

    raw = init_raw_params(k_p, node_features)
    packed = pack_params(raw, node_features)

    # (1) Module-faithful path: DCRNN called with H=None -> zero hidden state.
    #     Default row_tile covers all 16 nodes in a single grid step.
    y0, h0 = recurrent_gcn_dcrnn_forward(packed, x, edge_index, edge_weight)
    # (2) Extra validation with a nonzero previous hidden state and a forced
    #     multi-block grid (row_tile=8 -> 2 parallel node-row blocks).
    h_prev = jax.random.normal(k_h, (num_nodes, HIDDEN), jnp.float32)
    y1, h1 = recurrent_gcn_dcrnn_forward(packed, x, edge_index, edge_weight,
                                         h_prev=h_prev, row_tile=8)
    jax.block_until_ready((y0, h0, y1, h1))

    y0_ref, h0_ref = dcrnn_linear_reference(raw, x, np.zeros((num_nodes, HIDDEN)))
    y1_ref, h1_ref = dcrnn_linear_reference(raw, x, h_prev)

    assert y0.shape == (num_nodes, 1) and h0.shape == (num_nodes, HIDDEN)
    for got, ref in ((y0, y0_ref), (h0, h0_ref), (y1, y1_ref), (h1, h1_ref)):
        got = np.asarray(got)
        assert got.shape == ref.shape
        assert np.all(np.isfinite(got))
        assert np.allclose(got, ref, rtol=1e-3, atol=1e-3), float(np.max(np.abs(got - ref)))

    print("KERNEL_OK")
</pallas_src>

<mosaic_0001>
module attributes {stable_mosaic.version = 11 : i64} {
  func.func @dcrnn_step_kernel(%arg0: i32, %arg1: memref<16x5xf32, #tpu.memory_space<vmem>>, %arg2: memref<16x32xf32, #tpu.memory_space<vmem>>, %arg3: memref<5x96xf32, #tpu.memory_space<vmem>>, %arg4: memref<32x96xf32, #tpu.memory_space<vmem>>, %arg5: memref<32x128xf32, #tpu.memory_space<vmem>>, %arg6: memref<1x128xf32, #tpu.memory_space<vmem>>, %arg7: memref<16x128xf32, #tpu.memory_space<vmem>>, %arg8: memref<16x32xf32, #tpu.memory_space<vmem>>) attributes {dimension_semantics = [#tpu.dimension_semantics<parallel>], iteration_bounds = array<i64: 1>, scalar_prefetch = 0 : i64, scratch_operands = 0 : i64, tpu.core_type = #tpu.core_type<tc>, window_params = [{transform_indices = @transform_0, window_bounds = array<i64: 16, 5>}, {transform_indices = @transform_1, window_bounds = array<i64: 16, 32>}, {pipeline_mode = #tpu.pipeline_mode<synchronous>, transform_indices = @transform_2, window_bounds = array<i64: 5, 96>}, {pipeline_mode = #tpu.pipeline_mode<synchronous>, transform_indices = @transform_3, window_bounds = array<i64: 32, 96>}, {pipeline_mode = #tpu.pipeline_mode<synchronous>, transform_indices = @transform_4, window_bounds = array<i64: 32, 128>}, {pipeline_mode = #tpu.pipeline_mode<synchronous>, transform_indices = @transform_5, window_bounds = array<i64: 1, 128>}, {transform_indices = @transform_6, window_bounds = array<i64: 16, 128>}, {transform_indices = @transform_7, window_bounds = array<i64: 16, 32>}]} {
    %c0 = arith.constant 0 : index
    %c0_0 = arith.constant 0 : index
    %0 = vector.load %arg1[%c0, %c0_0] : memref<16x5xf32, #tpu.memory_space<vmem>>, vector<16x5xf32>
    %c0_1 = arith.constant 0 : index
    %c0_2 = arith.constant 0 : index
    %1 = vector.load %arg2[%c0_1, %c0_2] : memref<16x32xf32, #tpu.memory_space<vmem>>, vector<16x32xf32>
    %c0_3 = arith.constant 0 : index
    %c0_4 = arith.constant 0 : index
    %2 = vector.load %arg4[%c0_3, %c0_4] : memref<32x96xf32, #tpu.memory_space<vmem>>, vector<32x96xf32>
    %c0_5 = arith.constant 0 : index
    %c0_6 = arith.constant 0 : index
    %3 = vector.load %arg3[%c0_5, %c0_6] : memref<5x96xf32, #tpu.memory_space<vmem>>, vector<5x96xf32>
    %cst = arith.constant dense<0.000000e+00> : vector<16x96xf32>
    %4 = tpu.matmul %0, %3, %cst {dimension_numbers = #tpu.dot_dimension_numbers<[1], [0], [0], [1], [0, 0, 1, 1], [], []>} : vector<16x5xf32>, vector<5x96xf32>, vector<16x96xf32> -> vector<16x96xf32>
    %5 = vector.extract_strided_slice %4 {offsets = [0, 0], sizes = [16, 64], strides = [1, 1]} : vector<16x96xf32> to vector<16x64xf32>
    %6 = vector.extract_strided_slice %2 {offsets = [0, 0], sizes = [32, 64], strides = [1, 1]} : vector<32x96xf32> to vector<32x64xf32>
    %cst_7 = arith.constant dense<0.000000e+00> : vector<16x64xf32>
    %7 = tpu.matmul %1, %6, %cst_7 {dimension_numbers = #tpu.dot_dimension_numbers<[1], [0], [0], [1], [0, 0, 1, 1], [], []>} : vector<16x32xf32>, vector<32x64xf32>, vector<16x64xf32> -> vector<16x64xf32>
    %8 = arith.addf %5, %7 : vector<16x64xf32>
    %9 = arith.negf %8 : vector<16x64xf32>
    %10 = math.exp %9 : vector<16x64xf32>
    %cst_8 = arith.constant 1.000000e+00 : f32
    %11 = vector.broadcast %cst_8 : f32 to vector<16x64xf32>
    %12 = arith.addf %11, %10 : vector<16x64xf32>
    %13 = arith.divf %11, %12 : vector<16x64xf32>
    %14 = vector.extract_strided_slice %13 {offsets = [0, 0], sizes = [16, 32], strides = [1, 1]} : vector<16x64xf32> to vector<16x32xf32>
    %15 = vector.extract_strided_slice %13 {offsets = [0, 32], sizes = [16, 32], strides = [1, 1]} : vector<16x64xf32> to vector<16x32xf32>
    %16 = vector.extract_strided_slice %4 {offsets = [0, 64], sizes = [16, 32], strides = [1, 1]} : vector<16x96xf32> to vector<16x32xf32>
    %17 = arith.mulf %1, %15 : vector<16x32xf32>
    %18 = vector.extract_strided_slice %2 {offsets = [0, 64], sizes = [32, 32], strides = [1, 1]} : vector<32x96xf32> to vector<32x32xf32>
    %cst_9 = arith.constant dense<0.000000e+00> : vector<16x32xf32>
    %19 = tpu.matmul %17, %18, %cst_9 {dimension_numbers = #tpu.dot_dimension_numbers<[1], [0], [0], [1], [0, 0, 1, 1], [], []>} : vector<16x32xf32>, vector<32x32xf32>, vector<16x32xf32> -> vector<16x32xf32>
    %20 = arith.addf %16, %19 : vector<16x32xf32>
    %21 = math.tanh %20 : vector<16x32xf32>
    %22 = arith.mulf %14, %1 : vector<16x32xf32>
    %cst_10 = arith.constant 1.000000e+00 : f32
    %23 = vector.broadcast %cst_10 : f32 to vector<16x32xf32>
    %24 = arith.subf %23, %14 : vector<16x32xf32>
    %25 = arith.mulf %24, %21 : vector<16x32xf32>
    %26 = arith.addf %22, %25 : vector<16x32xf32>
    %c0_11 = arith.constant 0 : index
    %c0_12 = arith.constant 0 : index
    %27 = vector.load %arg8[%c0_11, %c0_12] : memref<16x32xf32, #tpu.memory_space<vmem>>, vector<16x32xf32>
    tpu.vector_store %arg8[%c0_11, %c0_12], %26 {strides = array<i32>} : memref<16x32xf32, #tpu.memory_space<vmem>>, vector<16x32xf32>,
    %cst_13 = arith.constant 0.000000e+00 : f32
    %28 = vector.broadcast %cst_13 : f32 to vector<16x32xf32>
    %29 = arith.maximumf %26, %28 : vector<16x32xf32>
    %c0_14 = arith.constant 0 : index
    %c0_15 = arith.constant 0 : index
    %30 = vector.load %arg5[%c0_14, %c0_15] : memref<32x128xf32, #tpu.memory_space<vmem>>, vector<32x128xf32>
    %cst_16 = arith.constant dense<0.000000e+00> : vector<16x128xf32>
    %31 = tpu.matmul %29, %30, %cst_16 {dimension_numbers = #tpu.dot_dimension_numbers<[1], [0], [0], [1], [0, 0, 1, 1], [], []>} : vector<16x32xf32>, vector<32x128xf32>, vector<16x128xf32> -> vector<16x128xf32>
    %c0_17 = arith.constant 0 : index
    %c0_18 = arith.constant 0 : index
    %32 = vector.load %arg6[%c0_17, %c0_18] : memref<1x128xf32, #tpu.memory_space<vmem>>, vector<1x128xf32>
    %33 = vector.broadcast %32 : vector<1x128xf32> to vector<16x128xf32>
    %34 = arith.addf %31, %33 : vector<16x128xf32>
    %c0_19 = arith.constant 0 : index
    %c0_20 = arith.constant 0 : index
    %35 = vector.load %arg7[%c0_19, %c0_20] : memref<16x128xf32, #tpu.memory_space<vmem>>, vector<16x128xf32>
    tpu.vector_store %arg7[%c0_19, %c0_20], %34 {strides = array<i32>} : memref<16x128xf32, #tpu.memory_space<vmem>>, vector<16x128xf32>,
    return
  }
  func.func @transform_0(%arg0: i32) -> (i32, i32) {
    %c0_i32 = arith.constant 0 : i32
    %c0_i32_0 = arith.constant 0 : i32
    return %arg0, %c0_i32 : i32, i32
  }
  func.func @transform_1(%arg0: i32) -> (i32, i32) {
    %c0_i32 = arith.constant 0 : i32
    %c0_i32_0 = arith.constant 0 : i32
    return %arg0, %c0_i32 : i32, i32
  }
  func.func @transform_2(%arg0: i32) -> (i32, i32) {
    %c0_i32 = arith.constant 0 : i32
    %c0_i32_0 = arith.constant 0 : i32
    %c0_i32_1 = arith.constant 0 : i32
    return %c0_i32, %c0_i32_0 : i32, i32
  }
  func.func @transform_3(%arg0: i32) -> (i32, i32) {
    %c0_i32 = arith.constant 0 : i32
    %c0_i32_0 = arith.constant 0 : i32
    %c0_i32_1 = arith.constant 0 : i32
    return %c0_i32, %c0_i32_0 : i32, i32
  }
  func.func @transform_4(%arg0: i32) -> (i32, i32) {
    %c0_i32 = arith.constant 0 : i32
    %c0_i32_0 = arith.constant 0 : i32
    %c0_i32_1 = arith.constant 0 : i32
    return %c0_i32, %c0_i32_0 : i32, i32
  }
  func.func @transform_5(%arg0: i32) -> (i32, i32) {
    %c0_i32 = arith.constant 0 : i32
    %c0_i32_0 = arith.constant 0 : i32
    %c0_i32_1 = arith.constant 0 : i32
    return %c0_i32, %c0_i32_0 : i32, i32
  }
  func.func @transform_6(%arg0: i32) -> (i32, i32) {
    %c0_i32 = arith.constant 0 : i32
    %c0_i32_0 = arith.constant 0 : i32
    return %arg0, %c0_i32 : i32, i32
  }
  func.func @transform_7(%arg0: i32) -> (i32, i32) {
    %c0_i32 = arith.constant 0 : i32
    %c0_i32_0 = arith.constant 0 : i32
    return %arg0, %c0_i32 : i32, i32
  }
}

</mosaic_0001>

<llo_original>
// kernel: tpu_custom_call.1
$region0: #{tpu_custom_call.1}
  #allocation0 [shape = 'u32[]', space=smem, size = 0x4, offset = 0x4, fixed_abs, tag = 'smem constant byte address 0x4 - core index']
  #allocation1 [shape = 'u32[144,128]{1,0:T(1,128)}', space=vmem, size = 0x12000, scoped, tag = 'internal scratch']
  %s0 = inlined_call_operand.vmem [shape: f32[16,5], index: 0, kind: input, shape index: {}]
  %s1 = inlined_call_operand.vmem [shape: f32[16,32], index: 1, kind: input, shape index: {}]
  %s2 = inlined_call_operand.vmem [shape: f32[5,96], index: 2, kind: input, shape index: {}]
  %s3 = inlined_call_operand.hbm [shape: f32[32,96], index: 3, kind: input, shape index: {}]
  %s4 = inlined_call_operand.hbm [shape: f32[32,128], index: 4, kind: input, shape index: {}]
  %s5 = inlined_call_operand.vmem [shape: f32[1,128], index: 5, kind: input, shape index: {}]
  %s6 = inlined_call_operand.hbm [shape: f32[16,128], index: 6, kind: output, shape index: {0}]
  %s7 = inlined_call_operand.hbm [shape: f32[16,32], index: 7, kind: output, shape index: {1}]
  %8 = xla_tuple %s6, %s7
  %s9 = sld [smem:[#allocation0]]
  $region50: #{tpu_custom_call.1} parent=0
    _
  %s11 = ssub.s32 1, %s9
  %s12 = scalar_select 0, %s11, %s9
  $region1: #{tpu_custom_call.1} parent=0
    #allocation2 [shape = 'u8[16384]{0}', space=vmem, size = 0x4000, scoped, tag = 'input window, operand 3, single buffered']
    #allocation3 [shape = 's32[1]{0}', space=sflag, size = 0x4, scoped, tag = 'scoped memory for tpu_custom_call.1']
    #allocation4 [shape = 's32[1]{0}', space=sflag, size = 0x4, scoped, tag = 'scoped memory for tpu_custom_call.1']
    #allocation5 [shape = 'u8[16384]{0}', space=vmem, size = 0x4000, scoped, tag = 'input window, operand 4, single buffered']
    #allocation6 [shape = 's32[1]{0}', space=sflag, size = 0x4, scoped, tag = 'scoped memory for tpu_custom_call.1']
    #allocation7 [shape = 'u8[8192]{0}', space=vmem, size = 0x2000, scoped, tag = 'output window, operand 0, single buffered']
    #allocation8 [shape = 'u8[8192]{0}', space=vmem, size = 0x2000, scoped, tag = 'output window, operand 1, single buffered']
    #allocation9 [shape = 's32[1]{0}', space=sflag, size = 0x4, scoped, tag = 'scoped memory for tpu_custom_call.1']
    %13 = vsyncpa [#allocation3], 0
    %14 = vsyncpa [#allocation6], 0
    %15 = vsyncpa [#allocation4], 0
    %16 = vsyncpa [#allocation9], 0
    // Predicated region
    $region2: #{tpu_custom_call.1} parent=1 // pred_check
      _
    $region3: #{tpu_custom_call.1} parent=1 // pred_check_branch
      %18 = sbr.rel (0) target = $region5
    $region4: #{tpu_custom_call.1} parent=1 // pred_region
      _
    $region5: #{tpu_custom_call.1} parent=1 // pred_fallthru
      _
    // Predicated region
    $region6: #{tpu_custom_call.1} parent=1 // pred_check
      _
    $region7: #{tpu_custom_call.1} parent=1 // pred_check_branch
      %20 = sbr.rel (0) target = $region9
    $region8: #{tpu_custom_call.1} parent=1 // pred_region
      _
    $region9: #{tpu_custom_call.1} parent=1 // pred_fallthru
      _
    // Predicated region
    $region10: #{tpu_custom_call.1} parent=1 // pred_check
      _
    $region11: #{tpu_custom_call.1} parent=1 // pred_check_branch
      %22 = sbr.rel (0) target = $region13
    $region12: #{tpu_custom_call.1} parent=1 // pred_region
      _
    $region13: #{tpu_custom_call.1} parent=1 // pred_fallthru
      _
    // Predicated region
    $region14: #{tpu_custom_call.1} parent=1 // pred_check
      _
    $region15: #{tpu_custom_call.1} parent=1 // pred_check_branch
      %24 = sbr.rel (0) target = $region17
    $region16: #{tpu_custom_call.1} parent=1 // pred_region
      %s26 = ssub.s32 512, 512
      %27 = vsyncadd [#allocation3], %s26
      %s28 = sshll.u32 [#allocation2], 4
      %s29 = int_to_ptr.vmem [resolvable:$true] %s28
      %34 = dma.hbm_to_vmem [thread:$0]  %s3, 512, %s29, [#allocation3], 128, 128, 8
    $region17: #{tpu_custom_call.1} parent=1 // pred_fallthru
      _
    // Predicated region
    $region18: #{tpu_custom_call.1} parent=1 // pred_check
      _
    $region19: #{tpu_custom_call.1} parent=1 // pred_check_branch
      %36 = sbr.rel (0) target = $region21
    $region20: #{tpu_custom_call.1} parent=1 // pred_region
      %s38 = ssub.s32 512, 512
      %39 = vsyncadd [#allocation6], %s38
      %s40 = sshll.u32 [#allocation5], 4
      %s41 = int_to_ptr.vmem [resolvable:$true] %s40
      %46 = dma.hbm_to_vmem [thread:$0]  %s4, 512, %s41, [#allocation6], 128, 128, 8
    $region21: #{tpu_custom_call.1} parent=1 // pred_fallthru
      _
    // Predicated region
    $region22: #{tpu_custom_call.1} parent=1 // pred_check
      _
    $region23: #{tpu_custom_call.1} parent=1 // pred_check_branch
      %48 = sbr.rel (0) target = $region25
    $region24: #{tpu_custom_call.1} parent=1 // pred_region
      _
    $region25: #{tpu_custom_call.1} parent=1 // pred_fallthru
      _
    // Predicated region
    $region26: #{tpu_custom_call.1} parent=1 // pred_check
      _
    $region27: #{tpu_custom_call.1} parent=1 // pred_check_branch
      %50 = sbr.rel (0) target = $region29
    $region28: #{tpu_custom_call.1} parent=1 // pred_region
      %51 = dma.done [#allocation3], 512
    $region29: #{tpu_custom_call.1} parent=1 // pred_fallthru
      _
    // Predicated region
    $region30: #{tpu_custom_call.1} parent=1 // pred_check
      _
    $region31: #{tpu_custom_call.1} parent=1 // pred_check_branch
      %53 = sbr.rel (0) target = $region33
    $region32: #{tpu_custom_call.1} parent=1 // pred_region
      %54 = dma.done [#allocation6], 512
    $region33: #{tpu_custom_call.1} parent=1 // pred_fallthru
      _
    %v55 = vld [vmem:[%s0] sm:$0xff]
    %v56 = vld [vmem:[%s0 + $0x8] sm:$0xff]
    %v57 = vld [vmem:[%s1] sm:$0xff]
    %v58 = vld [vmem:[%s1 + $0x8] sm:$0xff]
    %v59 = vld [vmem:[#allocation2] sm:$0xff]
    %v60 = vld [vmem:[#allocation2 + $0x8] sm:$0xff]
    %v61 = vld [vmem:[#allocation2 + $0x10] sm:$0xff]
    %v62 = vld [vmem:[#allocation2 + $0x18] sm:$0xff]
    %v63 = vld [vmem:[%s2] sm:$0x1f]
    %vm64 = vcmask 39936
    %v66 = vsel %vm64, %v55, 0
    %v69 = vsel %vm64, %v56, 0
    %vm71 = vcmask 1044480
    %v73 = vsel %vm71, %v63, 0
    %75 = vmatprep.subr.mxu0 0.0
    %76 = vmatpush1.msra.mxu0 0.0
    %77 = vmatprep.subr.mxu0 0.0
    %78 = vmatpush1.msra.mxu0 0.0
    %79 = vmatprep.subr.mxu0 0.0
    %80 = vmatpush1.msra.mxu0 0.0
    %81 = vmatprep.subr.mxu0 0.0
    %82 = vmatpush1.msra.mxu0 0.0
    %83 = vmatprep.subr.mxu0 0.0
    %84 = vmatpush1.msra.mxu0 0.0
    %85 = vmatprep.subr.mxu0 0.0
    %86 = vmatpush1.msra.mxu0 0.0
    %87 = vmatprep.subr.mxu0 0.0
    %88 = vmatpush1.msra.mxu0 0.0
    %89 = vmatprep.subr.mxu0 0.0
    %90 = vmatpush1.msra.mxu0 0.0
    %91 = vmatprep.subr.mxu0 0.0
    %92 = vmatpush1.msra.mxu0 0.0
    %93 = vmatprep.subr.mxu0 0.0
    %94 = vmatpush1.msra.mxu0 0.0
    %95 = vmatprep.subr.mxu0 0.0
    %96 = vmatpush1.msra.mxu0 0.0
    %97 = vmatprep.subr.mxu0 0.0
    %98 = vmatpush1.msra.mxu0 0.0
    %99 = vmatprep.subr.mxu0 0.0
    %100 = vmatpush1.msra.mxu0 0.0
    %101 = vmatprep.subr.mxu0 0.0
    %102 = vmatpush1.msra.mxu0 0.0
    %103 = vmatprep.subr.mxu0 0.0
    %104 = vmatpush1.msra.mxu0 0.0
    %105 = vmatprep.subr.mxu0 0.0
    %106 = vmatpush1.msra.mxu0 %v73
    %107 = vmatprep.subr.mxu0 0.0
    %108 = vmatpush2.msra.mxu0 0.0
    %109 = vmatprep.subr.mxu0 0.0
    %110 = vmatpush2.msra.mxu0 0.0
    %111 = vmatprep.subr.mxu0 0.0
    %112 = vmatpush2.msra.mxu0 0.0
    %113 = vmatprep.subr.mxu0 0.0
    %114 = vmatpush2.msra.mxu0 0.0
    %115 = vmatprep.subr.mxu0 0.0
    %116 = vmatpush2.msra.mxu0 0.0
    %117 = vmatprep.subr.mxu0 0.0
    %118 = vmatpush2.msra.mxu0 0.0
    %119 = vmatprep.subr.mxu0 0.0
    %120 = vmatpush2.msra.mxu0 0.0
    %121 = vmatprep.subr.mxu0 0.0
    %122 = vmatpush2.msra.mxu0 0.0
    %123 = vmatprep.subr.mxu0 0.0
    %124 = vmatpush2.msra.mxu0 0.0
    %125 = vmatprep.subr.mxu0 0.0
    %126 = vmatpush2.msra.mxu0 0.0
    %127 = vmatprep.subr.mxu0 0.0
    %128 = vmatpush2.msra.mxu0 0.0
    %129 = vmatprep.subr.mxu0 0.0
    %130 = vmatpush2.msra.mxu0 0.0
    %131 = vmatprep.subr.mxu0 0.0
    %132 = vmatpush2.msra.mxu0 0.0
    %133 = vmatprep.subr.mxu0 0.0
    %134 = vmatpush2.msra.mxu0 0.0
    %135 = vmatprep.subr.mxu0 0.0
    %136 = vmatpush2.msra.mxu0 0.0
    %137 = vmatprep.subr.mxu0 0.0
    %138 = vmatpush2.msra.mxu0 0.0
    %139 = vmatprep.mubr.f32.mxu0 0.0
    %140 = vmatmul.mubr.f32.gmra.mxu0 %v66
    %v141 = vpop.f32.mrf.mxu0
    %v142 = vadd.f32 0.0, %v141
    %v143 = vpop.f32.mrf.mxu0
    %144 = vmatprep.mubr.f32.mxu0 0.0
    %145 = vmatmul.mubr.f32.gmra.mxu0 %v69
    %v146 = vpop.f32.mrf.mxu0
    %v147 = vadd.f32 0.0, %v146
    %v148 = vpop.f32.mrf.mxu0
    %149 = vdwg.mxu0
    %vm150 = vcmask 261120
    %v152 = vsel %vm150, %v57, 0
    %v155 = vsel %vm150, %v58, 0
    %157 = vmatprep.subr.mxu0 0.0
    %158 = vmatpush1.msra.mxu0 0.0
    %159 = vmatprep.subr.mxu0 0.0
    %160 = vmatpush1.msra.mxu0 0.0
    %161 = vmatprep.subr.mxu0 0.0
    %162 = vmatpush1.msra.mxu0 0.0
    %163 = vmatprep.subr.mxu0 0.0
    %164 = vmatpush1.msra.mxu0 0.0
    %165 = vmatprep.subr.mxu0 0.0
    %166 = vmatpush1.msra.mxu0 0.0
    %167 = vmatprep.subr.mxu0 0.0
    %168 = vmatpush1.msra.mxu0 0.0
    %169 = vmatprep.subr.mxu0 0.0
    %170 = vmatpush1.msra.mxu0 0.0
    %171 = vmatprep.subr.mxu0 0.0
    %172 = vmatpush1.msra.mxu0 0.0
    %173 = vmatprep.subr.mxu0 0.0
    %174 = vmatpush1.msra.mxu0 0.0
    %175 = vmatprep.subr.mxu0 0.0
    %176 = vmatpush1.msra.mxu0 0.0
    %177 = vmatprep.subr.mxu0 0.0
    %178 = vmatpush1.msra.mxu0 0.0
    %179 = vmatprep.subr.mxu0 0.0
    %180 = vmatpush1.msra.mxu0 0.0
    %181 = vmatprep.subr.mxu0 0.0
    %182 = vmatpush1.msra.mxu0 %v62
    %183 = vmatprep.subr.mxu0 0.0
    %184 = vmatpush1.msra.mxu0 %v61
    %185 = vmatprep.subr.mxu0 0.0
    %186 = vmatpush1.msra.mxu0 %v60
    %187 = vmatprep.subr.mxu0 0.0
    %188 = vmatpush1.msra.mxu0 %v59
    %189 = vmatprep.subr.mxu0 0.0
    %190 = vmatpush2.msra.mxu0 0.0
    %191 = vmatprep.subr.mxu0 0.0
    %192 = vmatpush2.msra.mxu0 0.0
    %193 = vmatprep.subr.mxu0 0.0
    %194 = vmatpush2.msra.mxu0 0.0
    %195 = vmatprep.subr.mxu0 0.0
    %196 = vmatpush2.msra.mxu0 0.0
    %197 = vmatprep.subr.mxu0 0.0
    %198 = vmatpush2.msra.mxu0 0.0
    %199 = vmatprep.subr.mxu0 0.0
    %200 = vmatpush2.msra.mxu0 0.0
    %201 = vmatprep.subr.mxu0 0.0
    %202 = vmatpush2.msra.mxu0 0.0
    %203 = vmatprep.subr.mxu0 0.0
    %204 = vmatpush2.msra.mxu0 0.0
    %205 = vmatprep.subr.mxu0 0.0
    %206 = vmatpush2.msra.mxu0 0.0
    %207 = vmatprep.subr.mxu0 0.0
    %208 = vmatpush2.msra.mxu0 0.0
    %209 = vmatprep.subr.mxu0 0.0
    %210 = vmatpush2.msra.mxu0 0.0
    %211 = vmatprep.subr.mxu0 0.0
    %212 = vmatpush2.msra.mxu0 0.0
    %213 = vmatprep.subr.mxu0 0.0
    %214 = vmatpush2.msra.mxu0 0.0
    %215 = vmatprep.subr.mxu0 0.0
    %216 = vmatpush2.msra.mxu0 0.0
    %217 = vmatprep.subr.mxu0 0.0
    %218 = vmatpush2.msra.mxu0 0.0
    %219 = vmatprep.subr.mxu0 0.0
    %220 = vmatpush2.msra.mxu0 0.0
    %221 = vmatprep.mubr.f32.mxu0 0.0
    %222 = vmatmul.mubr.f32.gmra.mxu0 %v152
    %v223 = vpop.f32.mrf.mxu0
    %v224 = vadd.f32 0.0, %v223
    %v225 = vpop.f32.mrf.mxu0
    %226 = vmatprep.mubr.f32.mxu0 0.0
    %227 = vmatmul.mubr.f32.gmra.mxu0 %v155
    %v228 = vpop.f32.mrf.mxu0
    %v229 = vadd.f32 0.0, %v228
    %v230 = vpop.f32.mrf.mxu0
    %231 = vdwg.mxu0
    %v232 = vadd.f32 %v142, %v224
    %v233 = vadd.f32 %v147, %v229
    %v234 = vxor.u32 %v232, 2147483648
    %v235 = vxor.u32 %v233, 2147483648
    %v236 = vmul.f32 %v234, 1.442695
    %v237 = vpow.pop %v236
    %v238 = vmul.f32 %v235, 1.442695
    %v239 = vpow.pop %v238
    %v240 = vadd.f32 %v237, 1.0
    %v241 = vadd.f32 %v239, 1.0
    %v242 = vrcp.pop %v240
    %v243 = vmul.f32 1.0, %v242
    %v244 = vrcp.pop %v241
    %v245 = vmul.f32 1.0, %v244
    %248 = vrot.lane.b32.xlu0 %v243, 96
    %v249 = vpop.permute.xlu0 %248
    %250 = vrot.lane.b32.xlu0 %v245, 96
    %v251 = vpop.permute.xlu0 %250
    %v254 = vmul.f32 %v57, %v249
    %v255 = vmul.f32 %v58, %v251
    %260 = vrot.lane.b32.xlu0 %v59, 64
    %v261 = vpop.permute.xlu0 %260
    %262 = vrot.lane.b32.xlu0 %v60, 64
    %v263 = vpop.permute.xlu0 %262
    %264 = vrot.lane.b32.xlu0 %v61, 64
    %v265 = vpop.permute.xlu0 %264
    %266 = vrot.lane.b32.xlu0 %v62, 64
    %v267 = vpop.permute.xlu0 %266
    %v273 = vsel %vm150, %v254, 0
    %v276 = vsel %vm150, %v255, 0
    %278 = vmatprep.subr.mxu0 0.0
    %279 = vmatpush1.msra.mxu0 0.0
    %280 = vmatprep.subr.mxu0 0.0
    %281 = vmatpush1.msra.mxu0 0.0
    %282 = vmatprep.subr.mxu0 0.0
    %283 = vmatpush1.msra.mxu0 0.0
    %284 = vmatprep.subr.mxu0 0.0
    %285 = vmatpush1.msra.mxu0 0.0
    %286 = vmatprep.subr.mxu0 0.0
    %287 = vmatpush1.msra.mxu0 0.0
    %288 = vmatprep.subr.mxu0 0.0
    %289 = vmatpush1.msra.mxu0 0.0
    %290 = vmatprep.subr.mxu0 0.0
    %291 = vmatpush1.msra.mxu0 0.0
    %292 = vmatprep.subr.mxu0 0.0
    %293 = vmatpush1.msra.mxu0 0.0
    %294 = vmatprep.subr.mxu0 0.0
    %295 = vmatpush1.msra.mxu0 0.0
    %296 = vmatprep.subr.mxu0 0.0
    %297 = vmatpush1.msra.mxu0 0.0
    %298 = vmatprep.subr.mxu0 0.0
    %299 = vmatpush1.msra.mxu0 0.0
    %300 = vmatprep.subr.mxu0 0.0
    %301 = vmatpush1.msra.mxu0 0.0
    %302 = vmatprep.subr.mxu0 0.0
    %303 = vmatpush1.msra.mxu0 %v267
    %304 = vmatprep.subr.mxu0 0.0
    %305 = vmatpush1.msra.mxu0 %v265
    %306 = vmatprep.subr.mxu0 0.0
    %307 = vmatpush1.msra.mxu0 %v263
    %308 = vmatprep.subr.mxu0 0.0
    %309 = vmatpush1.msra.mxu0 %v261
    %310 = vmatprep.subr.mxu0 0.0
    %311 = vmatpush2.msra.mxu0 0.0
    %312 = vmatprep.subr.mxu0 0.0
    %313 = vmatpush2.msra.mxu0 0.0
    %314 = vmatprep.subr.mxu0 0.0
    %315 = vmatpush2.msra.mxu0 0.0
    %316 = vmatprep.subr.mxu0 0.0
    %317 = vmatpush2.msra.mxu0 0.0
    %318 = vmatprep.subr.mxu0 0.0
    %319 = vmatpush2.msra.mxu0 0.0
    %320 = vmatprep.subr.mxu0 0.0
    %321 = vmatpush2.msra.mxu0 0.0
    %322 = vmatprep.subr.mxu0 0.0
    %323 = vmatpush2.msra.mxu0 0.0
    %324 = vmatprep.subr.mxu0 0.0
    %325 = vmatpush2.msra.mxu0 0.0
    %326 = vmatprep.subr.mxu0 0.0
    %327 = vmatpush2.msra.mxu0 0.0
    %328 = vmatprep.subr.mxu0 0.0
    %329 = vmatpush2.msra.mxu0 0.0
    %330 = vmatprep.subr.mxu0 0.0
    %331 = vmatpush2.msra.mxu0 0.0
    %332 = vmatprep.subr.mxu0 0.0
    %333 = vmatpush2.msra.mxu0 0.0
    %334 = vmatprep.subr.mxu0 0.0
    %335 = vmatpush2.msra.mxu0 0.0
    %336 = vmatprep.subr.mxu0 0.0
    %337 = vmatpush2.msra.mxu0 0.0
    %338 = vmatprep.subr.mxu0 0.0
    %339 = vmatpush2.msra.mxu0 0.0
    %340 = vmatprep.subr.mxu0 0.0
    %341 = vmatpush2.msra.mxu0 0.0
    %342 = vmatprep.mubr.f32.mxu0 0.0
    %343 = vmatmul.mubr.f32.gmra.mxu0 %v273
    %v344 = vpop.f32.mrf.mxu0
    %v345 = vadd.f32 0.0, %v344
    %v346 = vpop.f32.mrf.mxu0
    %347 = vmatprep.mubr.f32.mxu0 0.0
    %348 = vmatmul.mubr.f32.gmra.mxu0 %v276
    %v349 = vpop.f32.mrf.mxu0
    %v350 = vadd.f32 0.0, %v349
    %v351 = vpop.f32.mrf.mxu0
    %352 = vdwg.mxu0
    %355 = vrot.lane.b32.xlu0 %v345, 64
    %v356 = vpop.permute.xlu0 %355
    %357 = vrot.lane.b32.xlu0 %v350, 64
    %v358 = vpop.permute.xlu0 %357
    %v361 = vadd.f32 %v142, %v356
    %v362 = vadd.f32 %v147, %v358
    %v363 = vtanh.pop %v361
    %v364 = vtanh.pop %v362
    %v365 = vmul.f32 %v243, %v57
    %v366 = vmul.f32 %v245, %v58
    %v367 = vsub.f32 1.0, %v243
    %v368 = vsub.f32 1.0, %v245
    %371 = vrot.lane.b32.xlu0 %v363, 64
    %v372 = vpop.permute.xlu0 %371
    %373 = vrot.lane.b32.xlu0 %v364, 64
    %v374 = vpop.permute.xlu0 %373
    %v377 = vmul.f32 %v367, %v372
    %v378 = vmul.f32 %v368, %v374
    %v379 = vadd.f32 %v365, %v377
    %v380 = vadd.f32 %v366, %v378
    %381 = vst.msk [vmem:[#allocation8] sm:$0xff] %vm150, %v379
    %382 = vst.msk [vmem:[#allocation8 + $0x8] sm:$0xff] %vm150, %v380
    %v383 = vmax.f32 %v379, 0.0
    %v384 = vmax.f32 %v380, 0.0
    %v385 = vld [vmem:[#allocation5] sm:$0xff]
    %v386 = vld [vmem:[#allocation5 + $0x8] sm:$0xff]
    %v387 = vld [vmem:[#allocation5 + $0x10] sm:$0xff]
    %v388 = vld [vmem:[#allocation5 + $0x18] sm:$0xff]
    %v389 = vld [vmem:[%s5] sm:$0x1]
    %v391 = vlaneseq
    %v392 = vshrl.u32 %v391, 7
    %v393 = vsub.s32 0, %v392
    %v394 = vrot.slane %v389, %v393
    %v397 = vsel %vm150, %v383, 0
    %v400 = vsel %vm150, %v384, 0
    %402 = vmatprep.subr.mxu0 0.0
    %403 = vmatpush1.msra.mxu0 0.0
    %404 = vmatprep.subr.mxu0 0.0
    %405 = vmatpush1.msra.mxu0 0.0
    %406 = vmatprep.subr.mxu0 0.0
    %407 = vmatpush1.msra.mxu0 0.0
    %408 = vmatprep.subr.mxu0 0.0
    %409 = vmatpush1.msra.mxu0 0.0
    %410 = vmatprep.subr.mxu0 0.0
    %411 = vmatpush1.msra.mxu0 0.0
    %412 = vmatprep.subr.mxu0 0.0
    %413 = vmatpush1.msra.mxu0 0.0
    %414 = vmatprep.subr.mxu0 0.0
    %415 = vmatpush1.msra.mxu0 0.0
    %416 = vmatprep.subr.mxu0 0.0
    %417 = vmatpush1.msra.mxu0 0.0
    %418 = vmatprep.subr.mxu0 0.0
    %419 = vmatpush1.msra.mxu0 0.0
    %420 = vmatprep.subr.mxu0 0.0
    %421 = vmatpush1.msra.mxu0 0.0
    %422 = vmatprep.subr.mxu0 0.0
    %423 = vmatpush1.msra.mxu0 0.0
    %424 = vmatprep.subr.mxu0 0.0
    %425 = vmatpush1.msra.mxu0 0.0
    %426 = vmatprep.subr.mxu0 0.0
    %427 = vmatpush1.msra.mxu0 %v388
    %428 = vmatprep.subr.mxu0 0.0
    %429 = vmatpush1.msra.mxu0 %v387
    %430 = vmatprep.subr.mxu0 0.0
    %431 = vmatpush1.msra.mxu0 %v386
    %432 = vmatprep.subr.mxu0 0.0
    %433 = vmatpush1.msra.mxu0 %v385
    %434 = vmatprep.subr.mxu0 0.0
    %435 = vmatpush2.msra.mxu0 0.0
    %436 = vmatprep.subr.mxu0 0.0
    %437 = vmatpush2.msra.mxu0 0.0
    %438 = vmatprep.subr.mxu0 0.0
    %439 = vmatpush2.msra.mxu0 0.0
    %440 = vmatprep.subr.mxu0 0.0
    %441 = vmatpush2.msra.mxu0 0.0
    %442 = vmatprep.subr.mxu0 0.0
    %443 = vmatpush2.msra.mxu0 0.0
    %444 = vmatprep.subr.mxu0 0.0
    %445 = vmatpush2.msra.mxu0 0.0
    %446 = vmatprep.subr.mxu0 0.0
    %447 = vmatpush2.msra.mxu0 0.0
    %448 = vmatprep.subr.mxu0 0.0
    %449 = vmatpush2.msra.mxu0 0.0
    %450 = vmatprep.subr.mxu0 0.0
    %451 = vmatpush2.msra.mxu0 0.0
    %452 = vmatprep.subr.mxu0 0.0
    %453 = vmatpush2.msra.mxu0 0.0
    %454 = vmatprep.subr.mxu0 0.0
    %455 = vmatpush2.msra.mxu0 0.0
    %456 = vmatprep.subr.mxu0 0.0
    %457 = vmatpush2.msra.mxu0 0.0
    %458 = vmatprep.subr.mxu0 0.0
    %459 = vmatpush2.msra.mxu0 0.0
    %460 = vmatprep.subr.mxu0 0.0
    %461 = vmatpush2.msra.mxu0 0.0
    %462 = vmatprep.subr.mxu0 0.0
    %463 = vmatpush2.msra.mxu0 0.0
    %464 = vmatprep.subr.mxu0 0.0
    %465 = vmatpush2.msra.mxu0 0.0
    %466 = vmatprep.mubr.f32.mxu0 0.0
    %467 = vmatmul.mubr.f32.gmra.mxu0 %v397
    %v468 = vpop.f32.mrf.mxu0
    %v469 = vadd.f32 %v394, %v468
    %v470 = vpop.f32.mrf.mxu0
    %471 = vmatprep.mubr.f32.mxu0 0.0
    %472 = vmatmul.mubr.f32.gmra.mxu0 %v400
    %v473 = vpop.f32.mrf.mxu0
    %v474 = vadd.f32 %v394, %v473
    %v475 = vpop.f32.mrf.mxu0
    %476 = vdwg.mxu0
    %477 = vst [vmem:[#allocation7] sm:$0xff] %v469
    %478 = vst [vmem:[#allocation7 + $0x8] sm:$0xff] %v474
    // Predicated region
    $region34: #{tpu_custom_call.1} parent=1 // pred_check
      _
    $region35: #{tpu_custom_call.1} parent=1 // pred_check_branch
      %480 = sbr.rel (0) target = $region37
    $region36: #{tpu_custom_call.1} parent=1 // pred_region
      %s482 = ssub.s32 256, 256
      %483 = vsyncadd [#allocation4], %s482
      %s484 = sshll.u32 [#allocation7], 4
      %s485 = int_to_ptr.vmem [resolvable:$true] %s484
      %490 = dma.vmem_to_hbm [thread:$0]  %s485, 256, %s6, [#allocation4], 128, 128, 8
    $region37: #{tpu_custom_call.1} parent=1 // pred_fallthru
      _
    // Predicated region
    $region38: #{tpu_custom_call.1} parent=1 // pred_check
      _
    $region39: #{tpu_custom_call.1} parent=1 // pred_check_branch
      %492 = sbr.rel (0) target = $region41
    $region40: #{tpu_custom_call.1} parent=1 // pred_region
      %s494 = ssub.s32 256, 256
      %495 = vsyncadd [#allocation9], %s494
      %s496 = sshll.u32 [#allocation8], 4
      %s497 = int_to_ptr.vmem [resolvable:$true] %s496
      %502 = dma.vmem_to_hbm [thread:$0]  %s497, 256, %s7, [#allocation9], 128, 128, 8
    $region41: #{tpu_custom_call.1} parent=1 // pred_fallthru
      _
    // Predicated region
    $region42: #{tpu_custom_call.1} parent=1 // pred_check
      _
    $region43: #{tpu_custom_call.1} parent=1 // pred_check_branch
      %504 = sbr.rel (0) target = $region45
    $region44: #{tpu_custom_call.1} parent=1 // pred_region
      %505 = dma.done [#allocation4], 256
    $region45: #{tpu_custom_call.1} parent=1 // pred_fallthru
      _
    // Predicated region
    $region46: #{tpu_custom_call.1} parent=1 // pred_check
      _
    $region47: #{tpu_custom_call.1} parent=1 // pred_check_branch
      %507 = sbr.rel (0) target = $region49
    $region48: #{tpu_custom_call.1} parent=1 // pred_region
      %508 = dma.done [#allocation9], 256
    $region49: #{tpu_custom_call.1} parent=1 // pred_fallthru
      _
    %509 = vsyncpa [#allocation3], 1
    %510 = vsyncpa [#allocation6], 1
    %511 = vsyncpa [#allocation4], 1
    %512 = vsyncpa [#allocation9], 1

</llo_original>
